<compile_context>
chip_gen: v7x
topology: tpu7x:2x2x1
jax: 0.10.0
libtpu: 0.0.40
codegen_flags: <defaults>
</compile_context>

<pallas_src>
import jax
import jax.numpy as jnp
from jax.experimental import pallas as pl
from jax.experimental.pallas import tpu as pltpu


# ------------------------------ helpers -------------------------------------
def _round_up(x, m):
    return ((x + m - 1) // m) * m


def _sublane(dtype) -> int:
    """Dtype-aware sublane multiple (8 for 4-byte, 16 for bf16, 32 for 1-byte)."""
    return max(8, 32 // jnp.dtype(dtype).itemsize)


def _best_tile(dim, cap, unit):
    """Largest multiple of `unit` <= cap that divides round_up(dim, unit).

    At most the final block along the axis is ragged (handled by Pallas
    boundary-block padding) so no host-side pad/slice of the array is needed.
    """
    units = _round_up(dim, unit) // unit
    k_max = max(1, min(cap // unit, units))
    for k in range(k_max, 0, -1):
        if units % k == 0:
            return k * unit
    return unit


def _choose_ci_tile(cin, cap):
    """Reduction tile: must divide Cin exactly (garbage in the contraction is
    not maskable).  Falls back to zero-padding Cin only when unavoidable."""
    if cin <= cap:
        return cin, cin                       # single reduction step
    for k in range(cap // 128, 0, -1):
        t = k * 128
        if cin % t == 0:
            return t, cin                     # exact multi-step reduction
    t = max(128, (min(cap, cin) // 128) * 128)
    return t, _round_up(cin, t)               # rare: zero-pad Cin only


# ----------------------------- Pallas kernel --------------------------------
def _make_kernel(multi_k, matmul_dtype, approx_sigmoid):
    """Build the conv1x1+SiLU kernel.

    multi_k=False: single reduction step, no accumulator scratch (o_ref written
    directly).  multi_k=True: f32 accumulator scratch with pl.when init/final.
    """

    def epilogue(acc_f32, b_ref, o_ref):
        z = acc_f32 + b_ref[...].astype(jnp.float32)
        e = jnp.exp(-z)                                   # EUP
        if approx_sigmoid:
            sig = pl.reciprocal(1.0 + e, approx=True)     # EUP vrcp
        else:
            sig = 1.0 / (1.0 + e)
        o_ref[...] = (z * sig).astype(o_ref.dtype)        # cast last

    def matmul(x_ref, w_ref):
        xv, wv = x_ref[...], w_ref[...]
        if matmul_dtype is not None:
            xv = xv.astype(matmul_dtype)
            wv = wv.astype(matmul_dtype)
        # (tco, tci) @ (tci, tp) -> f32 (tco, tp)
        return jnp.dot(wv, xv, preferred_element_type=jnp.float32)

    if multi_k:
        def kernel(x_ref, w_ref, b_ref, o_ref, acc_ref):
            k = pl.program_id(3)

            @pl.when(k == 0)
            def _():
                acc_ref[...] = jnp.zeros_like(acc_ref)

            acc_ref[...] += matmul(x_ref, w_ref)

            @pl.when(k == pl.num_programs(3) - 1)
            def _():
                epilogue(acc_ref[...], b_ref, o_ref)
    else:
        def kernel(x_ref, w_ref, b_ref, o_ref):
            epilogue(matmul(x_ref, w_ref), b_ref, o_ref)

    return kernel


def conv1x1_silu_pallas(x3, w, b, *, tile_p=1280, tile_co=1024, tile_ci=1024,
                        matmul_dtype=None, approx_sigmoid=True,
                        vmem_limit_bytes=None):
    """silu(1x1-conv(x) + b) on NCHW-flattened activations.

    x3 : [N, Cin, P]  (P = H*W; spatial axis maps to TPU lanes, so output
                       stores stay lane-dense even for tiny channel counts)
    w  : [Cout, Cin]  (PyTorch conv weight layout, 1x1 kernel squeezed)
    b  : [Cout]
    returns [N, Cout, P], dtype of x3.
    """
    N, Cin, P = x3.shape
    Cout = w.shape[0]
    out_dtype = x3.dtype

    # ------------- tile selection (no host pad of x / slice of y) -----------
    tp = P if P <= tile_p else _best_tile(P, tile_p, 128)
    sub = _sublane(out_dtype)
    tco = Cout if Cout <= tile_co else _best_tile(Cout, tile_co, sub)
    tci, cin_pad = _choose_ci_tile(Cin, tile_ci)
    if cin_pad != Cin:            # rare fallback: only the reduction axis pads
        x3 = jnp.pad(x3, ((0, 0), (0, cin_pad - Cin), (0, 0)))
        w = jnp.pad(w, ((0, 0), (0, cin_pad - Cin)))
    b2 = b.reshape(Cout, 1)

    p_tiles = pl.cdiv(P, tp)
    co_tiles = pl.cdiv(Cout, tco)
    k_tiles = cin_pad // tci
    multi_k = k_tiles > 1

    # v7x has 2 TensorCores: lead the grid with the largest parallel axis so
    # megacore sharding stays balanced even for N=1 inference (no effect on
    # single-TC v5e / v6e).  The Cin reduction axis stays last ("arbitrary").
    par = sorted([("p", p_tiles), ("co", co_tiles), ("n", N)],
                 key=lambda t: -t[1])
    order = [name for name, _ in par] + ["k"]
    grid = tuple(e for _, e in par) + (k_tiles,)

    def _imap(*logical):
        def index_map(*g):
            d = dict(zip(order, g))
            return tuple(0 if a == "0" else d[a] for a in logical)
        return index_map

    in_specs = [
        # activations: (Cin tile, spatial tile); re-read once per co tile
        # (co_tiles == 1 for typical YOLO sizes -> single pass over x).
        pl.BlockSpec((None, tci, tp), _imap("n", "k", "p")),
        # weights / bias: re-DMA'd whenever (co, k) changes; small vs. x and
        # resident only when co/k are both unchanged between steps.
        pl.BlockSpec((tco, tci), _imap("co", "k")),
        pl.BlockSpec((tco, 1), _imap("co", "0")),
    ]
    out_spec = pl.BlockSpec((None, tco, tp), _imap("n", "co", "p"))
    scratch = [pltpu.VMEM((tco, tp), jnp.float32)] if multi_k else []

    # VMEM budget: double-buffered tiles (+ accumulator), capped at 56 MiB so
    # the same plan also fits v7x's 64 MiB physical VMEM.
    in_b = jnp.dtype(x3.dtype).itemsize
    w_b = jnp.dtype(w.dtype).itemsize
    o_b = jnp.dtype(out_dtype).itemsize
    tile_bytes = tci * tp * in_b + tco * tci * w_b + tco * 4 + tco * tp * o_b
    est = 2 * tile_bytes + (tco * tp * 4 if multi_k else 0)
    if vmem_limit_bytes is None:
        vmem_limit_bytes = int(min(max(2 * est, 32 * 1024 * 1024),
                                   56 * 1024 * 1024))

    cost = pl.CostEstimate(
        flops=2 * N * Cout * Cin * P,
        transcendentals=N * Cout * P,
        bytes_accessed=(N * Cin * P * in_b + Cout * Cin * w_b + Cout * 4
                        + N * Cout * P * o_b),
    )

    return pl.pallas_call(
        _make_kernel(multi_k, matmul_dtype, approx_sigmoid),
        out_shape=jax.ShapeDtypeStruct((N, Cout, P), out_dtype),
        grid=grid,
        in_specs=in_specs,
        out_specs=out_spec,
        scratch_shapes=scratch,
        compiler_params=pltpu.CompilerParams(
            dimension_semantics=("parallel", "parallel", "parallel",
                                 "arbitrary"),
            vmem_limit_bytes=vmem_limit_bytes,
        ),
        cost_estimate=cost,
    )(x3, w, b2)


# ------------------------- dispatch + wrapped model -------------------------
def _conv1x1_silu_xla(x3, w, b):
    acc = jnp.einsum("oc,ncp->nop", w, x3, preferred_element_type=jnp.float32)
    acc = acc + b.astype(jnp.float32)[None, :, None]
    return (acc * jax.nn.sigmoid(acc)).astype(x3.dtype)


def conv1x1_silu(x3, w, b, *, use_pallas=None, **pallas_kwargs):
    """Tiny-channel layers (MXU ~idle, grid overhead dominates) stay on plain
    XLA; real YOLO 1x1 convs go to the Pallas kernel."""
    cin, cout = x3.shape[1], w.shape[0]
    if use_pallas is None:
        use_pallas = cin >= 32 and cout >= 32
    if not use_pallas:
        return _conv1x1_silu_xla(x3, w, b)
    return conv1x1_silu_pallas(x3, w, b, **pallas_kwargs)


def init_model_params(key, c_in, c_out, dtype=jnp.float32):
    """Deterministic params for the wrapped model: 1x1 Conv + fused-BN bias."""
    kw, kb = jax.random.split(key)
    w = (jax.random.normal(kw, (c_out, c_in), jnp.float32) * 0.1).astype(dtype)
    b = (jax.random.normal(kb, (c_out,), jnp.float32) * 0.01).astype(dtype)
    return {"w": w, "b": b}


def wrapped_model(params, x_nchw, **conv_kwargs):
    """YOLOv5-style Conv(c1, c2, k=1) + SiLU; NCHW in/out, pure reshapes only."""
    N, Cin, H, W = x_nchw.shape
    Cout = params["w"].shape[0]
    x3 = x_nchw.reshape(N, Cin, H * W)
    y3 = conv1x1_silu(x3, params["w"], params["b"], **conv_kwargs)
    return y3.reshape(N, Cout, H, W)


def auto_shape_forward(params, imgs, size=640, augment=False, profile=False,
                       **conv_kwargs):
    """Tensor path of autoShape.forward: imgs.to(p.device).type_as(p) -> model."""
    del size, augment, profile          # only relevant on the image-list path
    x = imgs.astype(params["w"].dtype)
    return wrapped_model(params, x, **conv_kwargs)


# ------------------------------- references ---------------------------------
def ref_forward(params, imgs):
    p_dtype = params["w"].dtype
    x = imgs.astype(p_dtype)
    acc = jnp.einsum("oc,nchw->nohw", params["w"].astype(jnp.float32),
                     x.astype(jnp.float32))
    acc = acc + params["b"].astype(jnp.float32)[None, :, None, None]
    return (acc * jax.nn.sigmoid(acc)).astype(p_dtype)


def conv1x1_silu_ref(x3, w, b):
    acc = jnp.einsum("oc,ncp->nop", w.astype(jnp.float32),
                     x3.astype(jnp.float32))
    acc = acc + b.astype(jnp.float32)[None, :, None]
    return (acc * jax.nn.sigmoid(acc)).astype(x3.dtype)


# ----------------------------------- demo -----------------------------------
if __name__ == "__main__":
    key = jax.random.PRNGKey(0)
    k1, k2, k3, k4 = jax.random.split(key, 4)

    # --- Test 1: tiny autoShape demo shape, exact epilogue, forced Pallas ---
    N, C_IN, H, W = 2, 4, 16, 16
    C_OUT = 8
    imgs = jax.random.uniform(k1, (N, C_IN, H, W), jnp.float32)   # NCHW input
    params = init_model_params(k2, C_IN, C_OUT, dtype=jnp.float32)

    fwd = jax.jit(lambda p, x: auto_shape_forward(
        p, x, use_pallas=True, approx_sigmoid=False))
    out = jax.block_until_ready(fwd(params, imgs))
    ref = ref_forward(params, imgs)
    assert out.shape == (N, C_OUT, H, W)
    assert jnp.allclose(out, ref, atol=1e-5, rtol=1e-5)

    # auto-dispatch path (tiny channels -> XLA) must agree too.
    out_auto = jax.block_until_ready(jax.jit(auto_shape_forward)(params, imgs))
    assert jnp.allclose(out_auto, ref, atol=1e-5, rtol=1e-5)

    # --- Test 2: ragged P/Cout boundary blocks, multi-step Cin reduction,
    #             bf16 MXU cast, EUP approx-sigmoid epilogue -----------------
    N2, CI2, CO2, P2 = 1, 256, 28, 400           # P=400 not a multiple of 128
    x2 = jax.random.uniform(k3, (N2, CI2, P2), jnp.float32)
    w2 = jax.random.normal(k4, (CO2, CI2), jnp.float32) * 0.05
    b2 = jnp.linspace(-0.5, 0.5, CO2, dtype=jnp.float32)
    f2 = jax.jit(lambda x, w, b: conv1x1_silu_pallas(
        x, w, b, tile_p=128, tile_co=16, tile_ci=128,
        matmul_dtype=jnp.bfloat16, approx_sigmoid=True))
    y2 = jax.block_until_ready(f2(x2, w2, b2))
    ref2 = conv1x1_silu_ref(x2, w2, b2)
    assert y2.shape == ref2.shape
    assert jnp.allclose(y2, ref2, atol=3e-2, rtol=3e-2)   # bf16/approx tol

    print("KERNEL_OK")
</pallas_src>

<mosaic_0001>
module attributes {stable_mosaic.version = 11 : i64} {
  func.func @kernel(%arg0: i32, %arg1: i32, %arg2: i32, %arg3: i32, %arg4: memref<1x4x256xf32, #tpu.memory_space<vmem>>, %arg5: memref<8x4xf32, #tpu.memory_space<vmem>>, %arg6: memref<8x1xf32, #tpu.memory_space<vmem>>, %arg7: memref<1x8x256xf32, #tpu.memory_space<vmem>>) attributes {dimension_semantics = [#tpu.dimension_semantics<parallel>, #tpu.dimension_semantics<parallel>, #tpu.dimension_semantics<parallel>, #tpu.dimension_semantics<arbitrary>], iteration_bounds = array<i64: 2, 1, 1, 1>, scalar_prefetch = 0 : i64, scratch_operands = 0 : i64, tpu.core_type = #tpu.core_type<tc>, window_params = [{transform_indices = @transform_0, window_bounds = array<i64: 1, 4, 256>}, {transform_indices = @transform_1, window_bounds = array<i64: 8, 4>}, {transform_indices = @transform_2, window_bounds = array<i64: 8, 1>}, {transform_indices = @transform_3, window_bounds = array<i64: 1, 8, 256>}]} {
    %c0 = arith.constant 0 : index
    %c0_0 = arith.constant 0 : index
    %c0_1 = arith.constant 0 : index
    %0 = vector.load %arg4[%c0, %c0_0, %c0_1] : memref<1x4x256xf32, #tpu.memory_space<vmem>>, vector<1x4x256xf32>
    %1 = vector.shape_cast %0 : vector<1x4x256xf32> to vector<4x256xf32>
    %c0_2 = arith.constant 0 : index
    %c0_3 = arith.constant 0 : index
    %2 = vector.load %arg5[%c0_2, %c0_3] : memref<8x4xf32, #tpu.memory_space<vmem>>, vector<8x4xf32>
    %cst = arith.constant dense<0.000000e+00> : vector<8x256xf32>
    %3 = tpu.matmul %2, %1, %cst {dimension_numbers = #tpu.dot_dimension_numbers<[1], [0], [0], [1], [0, 0, 1, 1], [], []>} : vector<8x4xf32>, vector<4x256xf32>, vector<8x256xf32> -> vector<8x256xf32>
    %c0_4 = arith.constant 0 : index
    %c0_5 = arith.constant 0 : index
    %4 = vector.load %arg6[%c0_4, %c0_5] : memref<8x1xf32, #tpu.memory_space<vmem>>, vector<8x1xf32>
    %5 = vector.broadcast %4 : vector<8x1xf32> to vector<8x256xf32>
    %6 = arith.addf %3, %5 : vector<8x256xf32>
    %cst_6 = arith.constant 0.000000e+00 : f32
    %7 = vector.broadcast %cst_6 : f32 to vector<8x256xf32>
    %8 = arith.subf %7, %6 : vector<8x256xf32>
    %9 = math.exp %8 : vector<8x256xf32>
    %cst_7 = arith.constant 1.000000e+00 : f32
    %10 = vector.broadcast %cst_7 : f32 to vector<8x256xf32>
    %11 = arith.addf %10, %9 : vector<8x256xf32>
    %cst_8 = arith.constant 1.000000e+00 : f32
    %12 = vector.broadcast %cst_8 : f32 to vector<8x256xf32>
    %13 = arith.divf %12, %11 : vector<8x256xf32>
    %14 = arith.mulf %6, %13 : vector<8x256xf32>
    %c0_9 = arith.constant 0 : index
    %c0_10 = arith.constant 0 : index
    %c0_11 = arith.constant 0 : index
    %15 = vector.load %arg7[%c0_9, %c0_10, %c0_11] : memref<1x8x256xf32, #tpu.memory_space<vmem>>, vector<1x8x256xf32>
    %16 = vector.shape_cast %15 : vector<1x8x256xf32> to vector<8x256xf32>
    %17 = vector.shape_cast %14 : vector<8x256xf32> to vector<1x8x256xf32>
    tpu.vector_store %arg7[%c0_9, %c0_10, %c0_11], %17 {strides = array<i32>} : memref<1x8x256xf32, #tpu.memory_space<vmem>>, vector<1x8x256xf32>,
    return
  }
  func.func @transform_0(%arg0: i32, %arg1: i32, %arg2: i32, %arg3: i32) -> (i32, i32, i32) {
    %c0_i32 = arith.constant 0 : i32
    return %arg0, %arg3, %arg1 : i32, i32, i32
  }
  func.func @transform_1(%arg0: i32, %arg1: i32, %arg2: i32, %arg3: i32) -> (i32, i32) {
    %c0_i32 = arith.constant 0 : i32
    return %arg2, %arg3 : i32, i32
  }
  func.func @transform_2(%arg0: i32, %arg1: i32, %arg2: i32, %arg3: i32) -> (i32, i32) {
    %c0_i32 = arith.constant 0 : i32
    %c0_i32_0 = arith.constant 0 : i32
    return %arg2, %c0_i32 : i32, i32
  }
  func.func @transform_3(%arg0: i32, %arg1: i32, %arg2: i32, %arg3: i32) -> (i32, i32, i32) {
    %c0_i32 = arith.constant 0 : i32
    return %arg0, %arg2, %arg1 : i32, i32, i32
  }
}

</mosaic_0001>

<llo_original>
// kernel: _lambda_.1
$region0: #{_lambda_.1}
  #allocation0 [shape = 'u32[]', space=smem, size = 0x4, offset = 0x4, fixed_abs, tag = 'smem constant byte address 0x4 - core index']
  #allocation1 [shape = 'u32[144,128]{1,0:T(1,128)}', space=vmem, size = 0x12000, scoped, tag = 'internal scratch']
  %s0 = inlined_call_operand.vmem [shape: f32[2,4,256], index: 0, kind: input, shape index: {}]
  %s1 = inlined_call_operand.vmem [shape: f32[8,4], index: 1, kind: input, shape index: {}]
  %s2 = inlined_call_operand.vmem [shape: f32[8,1], index: 2, kind: input, shape index: {}]
  %s3 = inlined_call_operand.vmem [shape: f32[2,8,256], index: 3, kind: output, shape index: {}]
  %s4 = sld [smem:[#allocation0]]
  $region45: #{_lambda_.1} parent=0
    _
  %s6 = ssub.s32 1, %s4
  %s7 = scalar_select 0, %s6, %s4
  loop: start=0, step=1, limit=4
  $region2: #{_lambda_.1} parent=0 // loop_pre_header
    _
  $region3: #{_lambda_.1} parent=0 // loop_header
    %s9 = sphi 0, %s13
    %p10 = scmp.ge.s32.totalorder %s9, 4
    %s16 = sphi 0, %s42
    %s17 = sphi 0, %s38
    %s18 = sphi 0, %s34
    %s19 = sphi 0, %s30
    %s20 = sphi 0, %s16
    %s21 = sphi 0, %s17
    %s22 = sphi 0, %s18
    %s23 = sphi 0, %s19
    %s24 = sphi 0, %s20
    %s25 = sphi 0, %s21
    %s26 = sphi 0, %s22
    %s27 = sphi 0, %s23
    %s49 = sphi 0, %s51
    %s52 = sphi 0, %s49
    %s53 = sphi 0, %s52
    %s69 = sphi 0, %s53
    %s77 = sphi 0, %s79
    %s80 = sphi 0, %s77
    %s81 = sphi 0, %s80
    %s97 = sphi 0, %s81
    %s103 = sphi 0, %s105
    %s106 = sphi 0, %s103
    %s107 = sphi 0, %s106
    %s123 = sphi 0, %s107
    %s133 = sphi 0, %s135
    %s136 = sphi 0, %s133
    %s137 = sphi 0, %s136
    %s153 = sphi 0, %s137
  $region4: #{_lambda_.1} parent=0 // loop_header_branch
    %12 = sbr.rel (%p10) target = $region8
  $region5: #{_lambda_.1} parent=0 // loop_body
    %s14 = ssub.s32 %s9, 1
    %s15 = ssub.s32 %s9, 2
    %s28 = sadd.s32 1, %s19
    %p29 = scmp.ge.s32.totalorder %s28, 1
    %s30 = scalar_select %p29, 0, %s28
    %s31 = sadd.s32 1, %s18
    %s32 = scalar_select %p29, %s31, %s18
    %p33 = scmp.ge.s32.totalorder %s32, 1
    %s34 = scalar_select %p33, 0, %s32
    %s35 = sadd.s32 1, %s17
    %s36 = scalar_select %p33, %s35, %s17
    %p37 = scmp.ge.s32.totalorder %s36, 1
    %s38 = scalar_select %p37, 0, %s36
    %s39 = sadd.s32 1, %s16
    %s40 = scalar_select %p37, %s39, %s16
    %p41 = scmp.ge.s32.totalorder %s40, 2
    %s42 = scalar_select %p41, 0, %s40
    %s43 = ssub.s32 %s16, %s42
    %s44 = ssub.s32 %s19, %s30
    %s45 = sor.u32 %s43, %s44
    %s46 = ssub.s32 %s17, %s38
    %s47 = sor.u32 %s45, %s46
    %p48 = scmp.eq.s32.totalorder %s47, 0
    %s50 = sadd.s32 %s49, 1
    %s51 = scalar_select %p48, %s49, %s50
    %p54 = pneg %p48
    %p55 = scmp.eq.s32.totalorder %s9, 1
    %p56 = por %p54, %p55
    %p57 = scmp.ne.s32.totalorder %s49, %s52
    %p58 = scmp.eq.s32.totalorder %s9, 0
    %p59 = por %p57, %p58
    %p60 = scmp.ne.s32.totalorder %s49, %s52
    %p61 = scmp.eq.s32.totalorder %s14, 1
    %p62 = por %p60, %p61
    %p63 = scmp.ne.s32.totalorder %s52, %s53
    %p64 = scmp.eq.s32.totalorder %s14, 0
    %p65 = por %p63, %p64
    %p66 = scmp.ne.s32.totalorder %s52, %s53
    %p67 = scmp.eq.s32.totalorder %s15, 1
    %p68 = por %p66, %p67
    %p70 = scmp.ne.s32.totalorder %s53, %s69
    %p71 = scmp.eq.s32.totalorder %s15, 0
    %p72 = por %p70, %p71
    %s73 = ssub.s32 %s18, %s34
    %s74 = ssub.s32 %s19, %s30
    %s75 = sor.u32 %s73, %s74
    %p76 = scmp.eq.s32.totalorder %s75, 0
    %s78 = sadd.s32 %s77, 1
    %s79 = scalar_select %p76, %s77, %s78
    %p82 = pneg %p76
    %p83 = scmp.eq.s32.totalorder %s9, 1
    %p84 = por %p82, %p83
    %p85 = scmp.ne.s32.totalorder %s77, %s80
    %p86 = scmp.eq.s32.totalorder %s9, 0
    %p87 = por %p85, %p86
    %p88 = scmp.ne.s32.totalorder %s77, %s80
    %p89 = scmp.eq.s32.totalorder %s14, 1
    %p90 = por %p88, %p89
    %p91 = scmp.ne.s32.totalorder %s80, %s81
    %p92 = scmp.eq.s32.totalorder %s14, 0
    %p93 = por %p91, %p92
    %p94 = scmp.ne.s32.totalorder %s80, %s81
    %p95 = scmp.eq.s32.totalorder %s15, 1
    %p96 = por %p94, %p95
    %p98 = scmp.ne.s32.totalorder %s81, %s97
    %p99 = scmp.eq.s32.totalorder %s15, 0
    %p100 = por %p98, %p99
    %s101 = ssub.s32 %s18, %s34
    %p102 = scmp.eq.s32.totalorder %s101, 0
    %s104 = sadd.s32 %s103, 1
    %s105 = scalar_select %p102, %s103, %s104
    %p108 = pneg %p102
    %p109 = scmp.eq.s32.totalorder %s9, 1
    %p110 = por %p108, %p109
    %p111 = scmp.ne.s32.totalorder %s103, %s106
    %p112 = scmp.eq.s32.totalorder %s9, 0
    %p113 = por %p111, %p112
    %p114 = scmp.ne.s32.totalorder %s103, %s106
    %p115 = scmp.eq.s32.totalorder %s14, 1
    %p116 = por %p114, %p115
    %p117 = scmp.ne.s32.totalorder %s106, %s107
    %p118 = scmp.eq.s32.totalorder %s14, 0
    %p119 = por %p117, %p118
    %p120 = scmp.ne.s32.totalorder %s106, %s107
    %p121 = scmp.eq.s32.totalorder %s15, 1
    %p122 = por %p120, %p121
    %p124 = scmp.ne.s32.totalorder %s107, %s123
    %p125 = scmp.eq.s32.totalorder %s15, 0
    %p126 = por %p124, %p125
    %s127 = ssub.s32 %s16, %s42
    %s128 = ssub.s32 %s18, %s34
    %s129 = sor.u32 %s127, %s128
    %s130 = ssub.s32 %s17, %s38
    %s131 = sor.u32 %s129, %s130
    %p132 = scmp.eq.s32.totalorder %s131, 0
    %s134 = sadd.s32 %s133, 1
    %s135 = scalar_select %p132, %s133, %s134
    %p138 = pneg %p132
    %p139 = scmp.eq.s32.totalorder %s9, 1
    %p140 = por %p138, %p139
    %p141 = scmp.ne.s32.totalorder %s133, %s136
    %p142 = scmp.eq.s32.totalorder %s9, 0
    %p143 = por %p141, %p142
    %p144 = scmp.ne.s32.totalorder %s133, %s136
    %p145 = scmp.eq.s32.totalorder %s14, 1
    %p146 = por %p144, %p145
    %p147 = scmp.ne.s32.totalorder %s136, %s137
    %p148 = scmp.eq.s32.totalorder %s14, 0
    %p149 = por %p147, %p148
    %p150 = scmp.ne.s32.totalorder %s136, %s137
    %p151 = scmp.eq.s32.totalorder %s15, 1
    %p152 = por %p150, %p151
    %p154 = scmp.ne.s32.totalorder %s137, %s153
    %p155 = scmp.eq.s32.totalorder %s15, 0
    %p156 = por %p154, %p155
    %p157 = scmp.le.s32.totalorder 1, %s9
    %p158 = scmp.lt.s32.totalorder %s9, 3
    %p159 = pnand %p157, %p158
    %p160 = pneg %p159
    // Predicated region
    $region9: #{_lambda_.1} parent=5 // pred_check
      _
    $region10: #{_lambda_.1} parent=5 // pred_check_branch
      %162 = sbr.rel (%p159) target = $region12
    $region11: #{_lambda_.1} parent=5 // pred_region
      %s163 = ssub.s32 %s9, 1
      // Predicated region
      $region13: #{_lambda_.1} parent=11 // pred_check
        %p164 = pneg %p93
      $region14: #{_lambda_.1} parent=11 // pred_check_branch
        %166 = sbr.rel (%p164) target = $region16
      $region15: #{_lambda_.1} parent=11 // pred_region
        %p167 = scmp.lt.s32.totalorder %s22, 0
        %s168 = scalar_select %p167, %s22, 0
        %p169 = scmp.lt.s32.totalorder %s23, 0
        %s170 = scalar_select %p169, %s23, 0
        %s171 = sadd.s32 %s170, %s168
        %s172 = smul.addr %s171, 8
        %s173 = scalar_lea.vmem %s1, %s172
      $region16: #{_lambda_.1} parent=11 // pred_fallthru
        _
      // Predicated region
      $region17: #{_lambda_.1} parent=11 // pred_check
        %p174 = pneg %p119
      $region18: #{_lambda_.1} parent=11 // pred_check_branch
        %176 = sbr.rel (%p174) target = $region20
      $region19: #{_lambda_.1} parent=11 // pred_region
        %p177 = scmp.lt.s32.totalorder %s22, 0
        %s178 = scalar_select %p177, %s22, 0
        %s179 = smul.addr %s178, 8
        %s180 = scalar_lea.vmem %s2, %s179
      $region20: #{_lambda_.1} parent=11 // pred_fallthru
        _
    $region12: #{_lambda_.1} parent=5 // pred_fallthru
      _
    %p181 = scmp.lt.s32.totalorder %s9, 2
    // Predicated region
    $region21: #{_lambda_.1} parent=5 // pred_check
      %p182 = pneg %p181
    $region22: #{_lambda_.1} parent=5 // pred_check_branch
      %184 = sbr.rel (%p182) target = $region24
    $region23: #{_lambda_.1} parent=5 // pred_region
      // Predicated region
      $region25: #{_lambda_.1} parent=23 // pred_check
        %p185 = pneg %p59
      $region26: #{_lambda_.1} parent=23 // pred_check_branch
        %187 = sbr.rel (%p185) target = $region28
      $region27: #{_lambda_.1} parent=23 // pred_region
        %s188 = smul.u32 2, %s17
        %p189 = scmp.lt.s32.totalorder %s16, 1
        %s190 = scalar_select %p189, %s16, 1
        %p191 = scmp.lt.s32.totalorder %s19, 0
        %s192 = scalar_select %p191, %s19, 0
        %p193 = scmp.lt.s32.totalorder %s188, 1
        %s194 = scalar_select %p193, %s188, 1
        %s195 = smul.addr %s192, 2
        %s196 = sadd.s32 %s194, %s195
        %s197 = smul.addr %s190, 2
        %s198 = sadd.s32 %s196, %s197
        %s199 = smul.addr %s198, 4
        %s200 = scalar_lea.vmem %s0, %s199
        %s201 = smul.u32 2, %s17
      $region28: #{_lambda_.1} parent=23 // pred_fallthru
        _
    $region24: #{_lambda_.1} parent=5 // pred_fallthru
      _
    %p202 = scmp.le.s32.totalorder 1, %s9
    %p203 = scmp.lt.s32.totalorder %s9, 3
    %p204 = pnand %p202, %p203
    %p205 = pneg %p204
    // Predicated region
    $region29: #{_lambda_.1} parent=5 // pred_check
      _
    $region30: #{_lambda_.1} parent=5 // pred_check_branch
      %207 = sbr.rel (%p204) target = $region32
    $region31: #{_lambda_.1} parent=5 // pred_region
      %s208 = ssub.s32 %s9, 1
      %s209 = smul.u32 2, %s21
      %p210 = scmp.lt.s32.totalorder %s20, 1
      %s211 = scalar_select %p210, %s20, 1
      %p212 = scmp.lt.s32.totalorder %s23, 0
      %s213 = scalar_select %p212, %s23, 0
      %p214 = scmp.lt.s32.totalorder %s209, 1
      %s215 = scalar_select %p214, %s209, 1
      %s216 = smul.addr %s213, 2
      %s217 = sadd.s32 %s215, %s216
      %s218 = smul.addr %s211, 2
      %s219 = sadd.s32 %s217, %s218
      %s220 = smul.addr %s219, 4
      %s221 = scalar_lea.vmem %s0, %s220
      %p222 = pneg %p65
      %p223 = pneg %p62
      %p224 = scmp.lt.s32.totalorder %s22, 0
      %s225 = scalar_select %p224, %s22, 0
      %p226 = scmp.lt.s32.totalorder %s23, 0
      %s227 = scalar_select %p226, %s23, 0
      %s228 = sadd.s32 %s227, %s225
      %s229 = smul.addr %s228, 8
      %s230 = scalar_lea.vmem %s1, %s229
      %p231 = pneg %p93
      %p232 = pneg %p90
      %p233 = scmp.lt.s32.totalorder %s22, 0
      %s234 = scalar_select %p233, %s22, 0
      %s235 = smul.addr %s234, 8
      %s236 = scalar_lea.vmem %s2, %s235
      %p237 = pneg %p119
      %p238 = pneg %p116
      %p239 = pneg %p149
      %p240 = pneg %p146
      %s241 = smul.u32 2, %s21
      %p242 = scmp.lt.s32.totalorder %s20, 1
      %s243 = scalar_select %p242, %s20, 1
      %p244 = scmp.lt.s32.totalorder %s22, 0
      %s245 = scalar_select %p244, %s22, 0
      %p246 = scmp.lt.s32.totalorder %s241, 1
      %s247 = scalar_select %p246, %s241, 1
      %s248 = smul.addr %s245, 2
      %s249 = sadd.s32 %s247, %s248
      %s250 = smul.addr %s243, 2
      %s251 = sadd.s32 %s249, %s250
      %s252 = smul.addr %s251, 8
      %s253 = scalar_lea.vmem %s3, %s252
      %s254 = smul.u32 2, %s21
      %p255 = scmp.lt.s32.totalorder %s20, 1
      %s256 = scalar_select %p255, %s20, 1
      %p257 = scmp.lt.s32.totalorder %s23, 0
      %s258 = scalar_select %p257, %s23, 0
      %p259 = scmp.lt.s32.totalorder %s254, 1
      %s260 = scalar_select %p259, %s254, 1
      %s261 = smul.addr %s258, 2
      %s262 = sadd.s32 %s260, %s261
      %s263 = smul.addr %s256, 2
      %s264 = sadd.s32 %s262, %s263
      %s265 = smul.addr %s264, 4
      %s266 = scalar_lea.vmem %s0, %s265
      %s267 = smul.u32 2, %s21
      %p268 = scmp.lt.s32.totalorder %s22, 0
      %s269 = scalar_select %p268, %s22, 0
      %p270 = scmp.lt.s32.totalorder %s23, 0
      %s271 = scalar_select %p270, %s23, 0
      %s272 = sadd.s32 %s271, %s269
      %s273 = smul.addr %s272, 8
      %s274 = scalar_lea.vmem %s1, %s273
      %p275 = scmp.lt.s32.totalorder %s22, 0
      %s276 = scalar_select %p275, %s22, 0
      %s277 = smul.addr %s276, 8
      %s278 = scalar_lea.vmem %s2, %s277
      %s279 = smul.u32 2, %s21
      %p280 = scmp.lt.s32.totalorder %s20, 1
      %s281 = scalar_select %p280, %s20, 1
      %p282 = scmp.lt.s32.totalorder %s22, 0
      %s283 = scalar_select %p282, %s22, 0
      %p284 = scmp.lt.s32.totalorder %s279, 1
      %s285 = scalar_select %p284, %s279, 1
      %s286 = smul.addr %s283, 2
      %s287 = sadd.s32 %s285, %s286
      %s288 = smul.addr %s281, 2
      %s289 = sadd.s32 %s287, %s288
      %s290 = smul.addr %s289, 8
      %s291 = scalar_lea.vmem %s3, %s290
      %s292 = smul.u32 2, %s21
      %v293 = vld [vmem:[%s266] sm:$0xff]
      %v294 = vld [vmem:[%s274] sm:$0xff]
      %v295 = vld [vmem:[%s278] sm:$0xff]
      %297 = vset.pattern.permute.xlu0 0
      %298 = vperm.xlu0 %297, %v295
      %v299 = vpop.permute.xlu0 %298
      %v302 = vcombine.high %v293, %v293
      %vm303 = vcmask 31744
      %v305 = vsel %vm303, %v294, 0
      %vm307 = vcmask 1043456
      %v308 = vsel %vm307, %v293, 0
      %v310 = vsel %vm307, %v302, 0
      %312 = vmatprep.subr.mxu0 %v310
      %313 = vmatpush1.msra.mxu0 %v308
      %314 = vmatprep.subr.mxu0 0.0
      %315 = vmatpush1.msra.mxu0 0.0
      %316 = vmatprep.subr.mxu0 0.0
      %317 = vmatpush1.msra.mxu0 0.0
      %318 = vmatprep.subr.mxu0 0.0
      %319 = vmatpush1.msra.mxu0 0.0
      %320 = vmatprep.subr.mxu0 0.0
      %321 = vmatpush1.msra.mxu0 0.0
      %322 = vmatprep.subr.mxu0 0.0
      %323 = vmatpush1.msra.mxu0 0.0
      %324 = vmatprep.subr.mxu0 0.0
      %325 = vmatpush1.msra.mxu0 0.0
      %326 = vmatprep.subr.mxu0 0.0
      %327 = vmatpush1.msra.mxu0 0.0
      %328 = vmatprep.subr.mxu0 0.0
      %329 = vmatpush1.msra.mxu0 0.0
      %330 = vmatprep.subr.mxu0 0.0
      %331 = vmatpush1.msra.mxu0 0.0
      %332 = vmatprep.subr.mxu0 0.0
      %333 = vmatpush1.msra.mxu0 0.0
      %334 = vmatprep.subr.mxu0 0.0
      %335 = vmatpush1.msra.mxu0 0.0
      %336 = vmatprep.subr.mxu0 0.0
      %337 = vmatpush1.msra.mxu0 0.0
      %338 = vmatprep.subr.mxu0 0.0
      %339 = vmatpush1.msra.mxu0 0.0
      %340 = vmatprep.subr.mxu0 0.0
      %341 = vmatpush1.msra.mxu0 0.0
      %342 = vmatprep.subr.mxu0 0.0
      %343 = vmatpush1.msra.mxu0 0.0
      %344 = vmatprep.subr.mxu0 0.0
      %345 = vmatpush1.msra.mxu0 0.0
      %346 = vmatprep.subr.mxu0 0.0
      %347 = vmatpush1.msra.mxu0 0.0
      %348 = vmatprep.subr.mxu0 0.0
      %349 = vmatpush1.msra.mxu0 0.0
      %350 = vmatprep.subr.mxu0 0.0
      %351 = vmatpush1.msra.mxu0 0.0
      %352 = vmatprep.subr.mxu0 0.0
      %353 = vmatpush1.msra.mxu0 0.0
      %354 = vmatprep.subr.mxu0 0.0
      %355 = vmatpush1.msra.mxu0 0.0
      %356 = vmatprep.subr.mxu0 0.0
      %357 = vmatpush1.msra.mxu0 0.0
      %358 = vmatprep.subr.mxu0 0.0
      %359 = vmatpush1.msra.mxu0 0.0
      %360 = vmatprep.subr.mxu0 0.0
      %361 = vmatpush1.msra.mxu0 0.0
      %362 = vmatprep.subr.mxu0 0.0
      %363 = vmatpush1.msra.mxu0 0.0
      %364 = vmatprep.subr.mxu0 0.0
      %365 = vmatpush1.msra.mxu0 0.0
      %366 = vmatprep.subr.mxu0 0.0
      %367 = vmatpush1.msra.mxu0 0.0
      %368 = vmatprep.subr.mxu0 0.0
      %369 = vmatpush1.msra.mxu0 0.0
      %370 = vmatprep.subr.mxu0 0.0
      %371 = vmatpush1.msra.mxu0 0.0
      %372 = vmatprep.subr.mxu0 0.0
      %373 = vmatpush1.msra.mxu0 0.0
      %374 = vmatprep.subr.mxu0 0.0
      %375 = vmatpush1.msra.mxu0 0.0
      %376 = vmatprep.mubr.f32.mxu0 0.0
      %377 = vmatmul.mubr.f32.gmra.mrb[0].mxu0 %v305
      %v378 = vpop.f32.mrb[0].mxu0
      %v379 = vadd.f32 %v299, %v378
      %v380 = vpop.f32.mrb[0].mxu0
      %v381 = vadd.f32 %v299, %v380
      %382 = vdwg.mxu0
      %v383 = vsub.f32 0.0, %v379
      %v384 = vsub.f32 0.0, %v381
      %v385 = vmul.f32 %v383, 1.442695
      %v386 = vpow.pop %v385
      %v387 = vmul.f32 %v384, 1.442695
      %v388 = vpow.pop %v387
      %v389 = vadd.f32 %v386, 1.0
      %v390 = vadd.f32 %v388, 1.0
      %v391 = vrcp.pop %v389
      %v392 = vmul.f32 1.0, %v391
      %v393 = vrcp.pop %v390
      %v394 = vmul.f32 1.0, %v393
      %v395 = vmul.f32 %v379, %v392
      %v396 = vmul.f32 %v381, %v394
      %397 = vst [vmem:[%s291] sm:$0xff] %v395
      %398 = vst [vmem:[%s291 + $0x8] sm:$0xff] %v396
      %s399 = smul.u32 2, %s21
      %p400 = scmp.lt.s32.totalorder %s20, 1
      %s401 = scalar_select %p400, %s20, 1
      %p402 = scmp.lt.s32.totalorder %s22, 0
      %s403 = scalar_select %p402, %s22, 0
      %p404 = scmp.lt.s32.totalorder %s399, 1
      %s405 = scalar_select %p404, %s399, 1
      %s406 = smul.addr %s403, 2
      %s407 = sadd.s32 %s405, %s406
      %s408 = smul.addr %s401, 2
      %s409 = sadd.s32 %s407, %s408
      %s410 = smul.addr %s409, 8
      %s411 = scalar_lea.vmem %s3, %s410
      // Predicated region
      $region33: #{_lambda_.1} parent=31 // pred_check
        %p412 = pneg %p146
      $region34: #{_lambda_.1} parent=31 // pred_check_branch
        %414 = sbr.rel (%p412) target = $region36
      $region35: #{_lambda_.1} parent=31 // pred_region
        %s415 = smul.u32 2, %s21
      $region36: #{_lambda_.1} parent=31 // pred_fallthru
        _
    $region32: #{_lambda_.1} parent=5 // pred_fallthru
      _
    %p416 = scmp.le.s32.totalorder 2, %s9
    // Predicated region
    $region37: #{_lambda_.1} parent=5 // pred_check
      %p417 = pneg %p416
    $region38: #{_lambda_.1} parent=5 // pred_check_branch
      %419 = sbr.rel (%p417) target = $region40
    $region39: #{_lambda_.1} parent=5 // pred_region
      %s420 = ssub.s32 %s9, 2
      // Predicated region
      $region41: #{_lambda_.1} parent=39 // pred_check
        %p421 = pneg %p152
      $region42: #{_lambda_.1} parent=39 // pred_check_branch
        %423 = sbr.rel (%p421) target = $region44
      $region43: #{_lambda_.1} parent=39 // pred_region
        %s424 = smul.u32 2, %s25
        %p425 = scmp.lt.s32.totalorder %s24, 1
        %s426 = scalar_select %p425, %s24, 1
        %p427 = scmp.lt.s32.totalorder %s26, 0
        %s428 = scalar_select %p427, %s26, 0
        %p429 = scmp.lt.s32.totalorder %s424, 1
        %s430 = scalar_select %p429, %s424, 1
        %s431 = smul.addr %s428, 2
        %s432 = sadd.s32 %s430, %s431
        %s433 = smul.addr %s426, 2
        %s434 = sadd.s32 %s432, %s433
        %s435 = smul.addr %s434, 8
        %s436 = scalar_lea.vmem %s3, %s435
      $region44: #{_lambda_.1} parent=39 // pred_fallthru
        _
    $region40: #{_lambda_.1} parent=5 // pred_fallthru
      _
  $region6: #{_lambda_.1} parent=0 // loop_footer
    %s13 = sadd.s32 1, %s9
  $region7: #{_lambda_.1} parent=0 // loop_footer_branch
    %8 = sbr.rel target = $region3
  $region8: #{_lambda_.1} parent=0 // loop_exit
    _

</llo_original>
